<compile_context>
chip_gen: v6e
topology: v6e:2x2x1
jax: 0.10.0
libtpu: 0.0.40
codegen_flags: <defaults>
</compile_context>

<pallas_src>
import numpy as np
import jax
import jax.numpy as jnp
from jax import lax
from jax.experimental import pallas as pl
from jax.experimental.pallas import tpu as pltpu


HEAD_DIM = 16          # every head is nn.Linear(_, 16)
TILE_ROWS_MAX = 1024   # folded output rows per grid step (= TILE_ROWS_MAX * fold batch rows)


def _round_up(x, m):
    return ((x + m - 1) // m) * m


def _cdiv(a, b):
    return (a + b - 1) // b


def make_mlp_kernel(grid_shape, batch, fold, tile_rows):
    """Fused kernel: gather -> build [tile_rows, K] features -> one MXU dot -> one dense store."""
    w_grid = float(grid_shape[0])
    h_grid = float(grid_shape[1])

    def kernel(seed_ref, g_ref, w_ref, colc_ref, out_ref):
        seed = seed_ref[...]                              # [tile_rows, fold*seed_w] raw action ids
        c_cmp = colc_ref[0:1, :]                          # [1, K] one-hot compare target (-1e9 = never)
        loc_mask = colc_ref[1:2, :]                       # [1, K] 1.0 on Location columns
        c_2fc = colc_ref[2:3, :].astype(jnp.int32)        # [1, K] (2*fold_slot + pos) for Location cols

        # Lane-gather: raw action id for every feature-slab column.  One tiny MXU dot; exact,
        # since every gather column holds a single 1.0 (ids < 2^24 stay exact on any f32 path).
        aval = jnp.dot(seed, g_ref[...], preferred_element_type=jnp.float32)   # [tile_rows, K]

        # ---- Location math (computed full-width once, masked onto Location columns) ----------
        # fmod for non-negative ids via floor-divide + fix-ups (exact for non-power-of-two w too).
        q = jnp.floor(aval / w_grid)
        rem = aval - q * w_grid
        rem = jnp.where(rem < 0.0, rem + w_grid, rem)
        rem = jnp.where(rem >= w_grid, rem - w_grid, rem)
        y_val = -1.0 + 2.0 * rem / (h_grid - 1.0)
        x_val = -1.0 + 2.0 * (aval - rem) / (w_grid - 1.0)
        # torch.stack([y, x]).view(-1, 2): flat index m = 2*orig_row + pos -> y if m < batch else x.
        row = pl.program_id(0) * tile_rows + lax.broadcasted_iota(jnp.int32, (tile_rows, 1), 0)
        m = (2 * fold) * row + c_2fc                      # orig_row = folded_row*fold + fold_slot
        loc = jnp.where(m < batch, y_val, x_val)

        # ---- Scalar one-hots + the constant-1 bias column: ONE full-width compare -------------
        # (c_cmp = local index on scalar columns, 0.0 on the bias column whose gathered value is 0,
        #  -1e9 on Location / pad columns so they contribute nothing.)
        onehot = (jnp.trunc(aval) == c_cmp).astype(jnp.float32)

        feat = onehot + loc * loc_mask                    # [tile_rows, K] fused feature slab

        # One fused MXU matmul (bias rides the last weight row), one lane-dense store.
        out_ref[...] = jnp.dot(feat, w_ref[...],
                               preferred_element_type=jnp.float32).astype(out_ref.dtype)

    return kernel


def mlp_forward(action, params, action_shape, grid_shape):
    """JAX wrapper: fold F batch rows per output row (layout only), pack inputs, one pallas_call."""
    batch, n_heads = action.shape
    assert n_heads == len(action_shape)
    n_loc = min(2, n_heads)
    n_scalar = n_heads - n_loc
    in_dims = [2] * n_loc + [int(s) for s in action_shape[n_loc:]]
    head_off = [0]
    for d in in_dims:
        head_off.append(head_off[-1] + d)
    sum_k = head_off[-1]
    out_dim = HEAD_DIM * n_heads
    seed_w = 2 * n_loc + n_scalar

    # ---- fold factor: make the output >= 128 lanes (512 for the 4-head example) ---------------
    fold = max(1, min(8, 512 // out_dim))
    k_body = fold * sum_k
    k_pad = _round_up(k_body + 1, 8)          # +1 constant-1 bias column, rows padded to 8

    # ---- packed per-row seed: Location heads carry the stack([y,x]).view(-1,2) value
    # permutation (element (k,c) reads action (2k+c) mod B); Scalar heads carry raw ids.
    seed_cols = []
    for i in range(n_loc):
        a = action[:, i]
        seed_cols.append(jnp.concatenate([a, a]).reshape(batch, 2))
    if n_scalar:
        seed_cols.append(action[:, n_loc:])
    seed = jnp.concatenate(seed_cols, axis=1).astype(jnp.float32)        # [B, seed_w]

    # ---- tiling over folded rows: big tiles, and >= 2 (even) grid steps when data permits
    # so v7x's second TensorCore gets work; still tiny vs VMEM on v5e/v6e/v7x.
    folded_b = _cdiv(batch, fold)
    n_steps = max(1, _cdiv(folded_b, TILE_ROWS_MAX))
    if n_steps == 1 and folded_b >= 16:
        n_steps = 2
    if n_steps > 1 and n_steps % 2:
        n_steps += 1
    tile_rows = _round_up(_cdiv(folded_b, n_steps), 8)
    padded_folded = _round_up(folded_b, tile_rows)
    padded_b = padded_folded * fold
    grid_steps = padded_folded // tile_rows

    if padded_b != batch:
        seed = jnp.pad(seed, ((0, padded_b - batch), (0, 0)))
    seed_folded = seed.reshape(padded_folded, fold * seed_w)             # pure layout fold

    # ---- fold-block-diagonal weight slab [k_pad, fold*out_dim]; bias folded in as last row ----
    w_slab = jnp.zeros((sum_k, out_dim), jnp.float32)
    for i in range(n_heads):
        w_slab = w_slab.at[head_off[i]:head_off[i + 1],
                           i * HEAD_DIM:(i + 1) * HEAD_DIM].set(params[f"w{i}"])
    bias_cat = jnp.concatenate([params[f"b{i}"] for i in range(n_heads)])    # [out_dim]
    w_fold = jnp.concatenate([
        jnp.kron(jnp.eye(fold, dtype=jnp.float32), w_slab),                  # diag fold blocks
        jnp.tile(bias_cat, fold)[None, :],                                   # bias row
        jnp.zeros((k_pad - k_body - 1, fold * out_dim), jnp.float32),        # pad rows
    ], axis=0)

    # ---- static per-column metadata + lane-gather matrix (pure layout, built in numpy) --------
    gmat = np.zeros((fold * seed_w, k_pad), np.float32)       # seed col -> feature col scatter
    c_cmp = np.full((k_pad,), -1.0e9, np.float32)             # never matches a real id
    loc_mask = np.zeros((k_pad,), np.float32)
    c_2fc = np.zeros((k_pad,), np.float32)
    for f in range(fold):
        base = f * sum_k
        for i in range(n_heads):
            if i < n_loc:
                for c in range(2):
                    j = base + head_off[i] + c
                    gmat[f * seed_w + 2 * i + c, j] = 1.0
                    loc_mask[j] = 1.0
                    c_2fc[j] = float(2 * f + c)
            else:
                p = f * seed_w + 2 * n_loc + (i - n_loc)
                for c in range(in_dims[i]):
                    j = base + head_off[i] + c
                    gmat[p, j] = 1.0
                    c_cmp[j] = float(c)
    c_cmp[k_body] = 0.0        # bias column: gathered value is 0 -> compare true -> constant 1.0
    colc = np.zeros((8, k_pad), np.float32)
    colc[0], colc[1], colc[2] = c_cmp, loc_mask, c_2fc

    kernel = make_mlp_kernel(tuple(grid_shape), batch, fold, tile_rows)

    out_folded = pl.pallas_call(
        kernel,
        out_shape=jax.ShapeDtypeStruct((padded_folded, fold * out_dim), jnp.float32),
        grid_spec=pltpu.PrefetchScalarGridSpec(
            num_scalar_prefetch=0,
            grid=(grid_steps,),
            in_specs=[
                pl.BlockSpec((tile_rows, fold * seed_w), lambda i: (i, 0)),   # batch-tiled seed
                pl.BlockSpec((fold * seed_w, k_pad), lambda i: (0, 0)),       # resident gather mat
                pl.BlockSpec((k_pad, fold * out_dim), lambda i: (0, 0)),      # resident weights
                pl.BlockSpec((8, k_pad), lambda i: (0, 0)),                   # resident col metadata
            ],
            out_specs=pl.BlockSpec((tile_rows, fold * out_dim), lambda i: (i, 0)),
        ),
        compiler_params=pltpu.CompilerParams(dimension_semantics=("parallel",)),
    )(seed_folded, jnp.asarray(gmat), w_fold, jnp.asarray(colc))

    # unfold: folded row R, lane block f  ->  original row R*fold + f   (pure layout)
    return out_folded.reshape(padded_b, out_dim)[:batch]


def ref_forward(action, params, action_shape, grid_shape):
    """Pure-JAX reference mirroring the PyTorch forward, for correctness checking."""
    w_grid, h_grid = grid_shape
    outs = []
    for i, s in enumerate(action_shape):
        a = action[:, i:i + 1]  # [B, 1]  (== action_i.unsqueeze(dim=1))
        if i < 2:
            rem = jnp.fmod(a, float(w_grid))
            x = -1.0 + 2.0 * (a - rem) / (w_grid - 1.0)
            y = -1.0 + 2.0 * rem / (h_grid - 1.0)
            feat = jnp.stack([y, x]).reshape(-1, 2)
        else:
            idx = a[:, 0].astype(jnp.int32)
            feat = jax.nn.one_hot(idx, s, dtype=jnp.float32)
        outs.append(feat @ params[f"w{i}"] + params[f"b{i}"])
    return jnp.concatenate(outs, axis=1)


def init_params(key, action_shape):
    """Deterministic init matching nn.Linear shapes (weights stored pre-transposed [in, 16])."""
    params = {}
    for i, s in enumerate(action_shape):
        fan_in = 2 if i < 2 else s
        kw, kb, key = jax.random.split(key, 3)
        bound = 1.0 / (fan_in ** 0.5)
        params[f"w{i}"] = jax.random.uniform(kw, (fan_in, HEAD_DIM), jnp.float32, -bound, bound)
        params[f"b{i}"] = jax.random.uniform(kb, (HEAD_DIM,), jnp.float32, -bound, bound)
    return params


if __name__ == "__main__":
    grid_shape = (16, 12)                 # (w, h)
    action_shape = (192, 192, 8, 4)       # heads 0,1 -> Location(grid_shape); heads 2,3 -> Scalar(S)
    batch = 8

    key = jax.random.PRNGKey(0)
    k_act, k_par = jax.random.split(key)

    maxvals = [grid_shape[0] * grid_shape[1]] * 2 + list(action_shape[2:])
    cols = [
        jax.random.randint(jax.random.fold_in(k_act, i), (batch, 1), 0, mv)
        for i, mv in enumerate(maxvals)
    ]
    action = jnp.concatenate(cols, axis=1).astype(jnp.float32)  # [B, n_heads]

    params = init_params(k_par, action_shape)

    out = mlp_forward(action, params, action_shape, grid_shape)
    out = jax.block_until_ready(out)

    ref = ref_forward(action, params, action_shape, grid_shape)
    assert out.shape == (batch, HEAD_DIM * len(action_shape)), out.shape
    max_err = float(jnp.max(jnp.abs(out - ref)))
    assert jnp.allclose(out, ref, atol=1e-5, rtol=1e-5), f"max abs err {max_err}"

    print("KERNEL_OK")
</pallas_src>

<mosaic_0001>
module attributes {stable_mosaic.version = 11 : i64} {
  func.func @kernel(%arg0: i32, %arg1: memref<8x48xf32, #tpu.memory_space<vmem>>, %arg2: memref<48x136xf32, #tpu.memory_space<vmem>>, %arg3: memref<136x512xf32, #tpu.memory_space<vmem>>, %arg4: memref<8x136xf32, #tpu.memory_space<vmem>>, %arg5: memref<8x512xf32, #tpu.memory_space<vmem>>) attributes {dimension_semantics = [#tpu.dimension_semantics<parallel>], iteration_bounds = array<i64: 1>, scalar_prefetch = 0 : i64, scratch_operands = 0 : i64, tpu.core_type = #tpu.core_type<tc>, window_params = [{transform_indices = @transform_0, window_bounds = array<i64: 8, 48>}, {pipeline_mode = #tpu.pipeline_mode<synchronous>, transform_indices = @transform_1, window_bounds = array<i64: 48, 136>}, {pipeline_mode = #tpu.pipeline_mode<synchronous>, transform_indices = @transform_2, window_bounds = array<i64: 136, 512>}, {pipeline_mode = #tpu.pipeline_mode<synchronous>, transform_indices = @transform_3, window_bounds = array<i64: 8, 136>}, {transform_indices = @transform_4, window_bounds = array<i64: 8, 512>}]} {
    %c0 = arith.constant 0 : index
    %c0_0 = arith.constant 0 : index
    %0 = vector.load %arg1[%c0, %c0_0] : memref<8x48xf32, #tpu.memory_space<vmem>>, vector<8x48xf32>
    %c0_1 = arith.constant 0 : index
    %c0_2 = arith.constant 0 : index
    %1 = vector.load %arg4[%c0_1, %c0_2] : memref<8x136xf32, #tpu.memory_space<vmem>>, vector<1x136xf32>
    %c1 = arith.constant 1 : index
    %c0_3 = arith.constant 0 : index
    %2 = vector.load %arg4[%c1, %c0_3] : memref<8x136xf32, #tpu.memory_space<vmem>>, vector<1x136xf32>
    %c2 = arith.constant 2 : index
    %c0_4 = arith.constant 0 : index
    %3 = vector.load %arg4[%c2, %c0_4] : memref<8x136xf32, #tpu.memory_space<vmem>>, vector<1x136xf32>
    %4 = arith.fptosi %3 : vector<1x136xf32> to vector<1x136xi32>
    %c0_5 = arith.constant 0 : index
    %c0_6 = arith.constant 0 : index
    %5 = vector.load %arg2[%c0_5, %c0_6] : memref<48x136xf32, #tpu.memory_space<vmem>>, vector<48x136xf32>
    %cst = arith.constant dense<0.000000e+00> : vector<8x136xf32>
    %6 = tpu.matmul %0, %5, %cst {dimension_numbers = #tpu.dot_dimension_numbers<[1], [0], [0], [1], [0, 0, 1, 1], [], []>} : vector<8x48xf32>, vector<48x136xf32>, vector<8x136xf32> -> vector<8x136xf32>
    %cst_7 = arith.constant 1.600000e+01 : f32
    %7 = vector.broadcast %cst_7 : f32 to vector<8x136xf32>
    %8 = arith.divf %6, %7 : vector<8x136xf32>
    %9 = math.floor %8 : vector<8x136xf32>
    %cst_8 = arith.constant 1.600000e+01 : f32
    %10 = vector.broadcast %cst_8 : f32 to vector<8x136xf32>
    %11 = arith.mulf %9, %10 : vector<8x136xf32>
    %12 = arith.subf %6, %11 : vector<8x136xf32>
    %cst_9 = arith.constant 0.000000e+00 : f32
    %13 = vector.broadcast %cst_9 : f32 to vector<8x136xf32>
    %14 = arith.cmpf olt, %12, %13 : vector<8x136xf32>
    %cst_10 = arith.constant 1.600000e+01 : f32
    %15 = vector.broadcast %cst_10 : f32 to vector<8x136xf32>
    %16 = arith.addf %12, %15 : vector<8x136xf32>
    %17 = arith.select %14, %16, %12 : vector<8x136xi1>, vector<8x136xf32>
    %cst_11 = arith.constant 1.600000e+01 : f32
    %18 = vector.broadcast %cst_11 : f32 to vector<8x136xf32>
    %19 = arith.cmpf oge, %17, %18 : vector<8x136xf32>
    %cst_12 = arith.constant 1.600000e+01 : f32
    %20 = vector.broadcast %cst_12 : f32 to vector<8x136xf32>
    %21 = arith.subf %17, %20 : vector<8x136xf32>
    %22 = arith.select %19, %21, %17 : vector<8x136xi1>, vector<8x136xf32>
    %cst_13 = arith.constant 2.000000e+00 : f32
    %23 = vector.broadcast %cst_13 : f32 to vector<8x136xf32>
    %24 = arith.mulf %23, %22 : vector<8x136xf32>
    %cst_14 = arith.constant 1.100000e+01 : f32
    %25 = vector.broadcast %cst_14 : f32 to vector<8x136xf32>
    %26 = arith.divf %24, %25 : vector<8x136xf32>
    %cst_15 = arith.constant -1.000000e+00 : f32
    %27 = vector.broadcast %cst_15 : f32 to vector<8x136xf32>
    %28 = arith.addf %27, %26 : vector<8x136xf32>
    %29 = arith.subf %6, %22 : vector<8x136xf32>
    %cst_16 = arith.constant 2.000000e+00 : f32
    %30 = vector.broadcast %cst_16 : f32 to vector<8x136xf32>
    %31 = arith.mulf %30, %29 : vector<8x136xf32>
    %cst_17 = arith.constant 1.500000e+01 : f32
    %32 = vector.broadcast %cst_17 : f32 to vector<8x136xf32>
    %33 = arith.divf %31, %32 : vector<8x136xf32>
    %cst_18 = arith.constant -1.000000e+00 : f32
    %34 = vector.broadcast %cst_18 : f32 to vector<8x136xf32>
    %35 = arith.addf %34, %33 : vector<8x136xf32>
    %c8_i32 = arith.constant 8 : i32
    %36 = arith.muli %arg0, %c8_i32 : i32
    %37 = tpu.iota {dimensions = array<i32: 0>} : vector<8x1xi32>
    %38 = vector.broadcast %36 : i32 to vector<8x1xi32>
    %39 = arith.addi %38, %37 : vector<8x1xi32>
    %c16_i32 = arith.constant 16 : i32
    %40 = vector.broadcast %c16_i32 : i32 to vector<8x1xi32>
    %41 = arith.muli %40, %39 : vector<8x1xi32>
    %42 = vector.broadcast %41 : vector<8x1xi32> to vector<8x136xi32>
    %43 = vector.broadcast %4 : vector<1x136xi32> to vector<8x136xi32>
    %44 = arith.addi %42, %43 : vector<8x136xi32>
    %c8_i32_19 = arith.constant 8 : i32
    %45 = vector.broadcast %c8_i32_19 : i32 to vector<8x136xi32>
    %46 = arith.cmpi slt, %44, %45 : vector<8x136xi32>
    %47 = arith.select %46, %28, %35 : vector<8x136xi1>, vector<8x136xf32>
    %cst_20 = arith.constant 0.000000e+00 : f32
    %48 = vector.broadcast %cst_20 : f32 to vector<8x136xf32>
    %49 = arith.cmpf olt, %6, %48 : vector<8x136xf32>
    %50 = math.ceil %6 : vector<8x136xf32>
    %51 = math.floor %6 : vector<8x136xf32>
    %52 = arith.select %49, %50, %51 : vector<8x136xi1>, vector<8x136xf32>
    %53 = vector.broadcast %1 : vector<1x136xf32> to vector<8x136xf32>
    %54 = arith.cmpf oeq, %52, %53 : vector<8x136xf32>
    %55 = arith.extui %54 : vector<8x136xi1> to vector<8x136xi32>
    %56 = arith.sitofp %55 : vector<8x136xi32> to vector<8x136xf32>
    %57 = vector.broadcast %2 : vector<1x136xf32> to vector<8x136xf32>
    %58 = arith.mulf %47, %57 : vector<8x136xf32>
    %59 = arith.addf %56, %58 : vector<8x136xf32>
    %c0_21 = arith.constant 0 : index
    %c0_22 = arith.constant 0 : index
    %60 = vector.load %arg3[%c0_21, %c0_22] : memref<136x512xf32, #tpu.memory_space<vmem>>, vector<136x512xf32>
    %cst_23 = arith.constant dense<0.000000e+00> : vector<8x512xf32>
    %61 = tpu.matmul %59, %60, %cst_23 {dimension_numbers = #tpu.dot_dimension_numbers<[1], [0], [0], [1], [0, 0, 1, 1], [], []>} : vector<8x136xf32>, vector<136x512xf32>, vector<8x512xf32> -> vector<8x512xf32>
    %c0_24 = arith.constant 0 : index
    %c0_25 = arith.constant 0 : index
    %62 = vector.load %arg5[%c0_24, %c0_25] : memref<8x512xf32, #tpu.memory_space<vmem>>, vector<8x512xf32>
    tpu.vector_store %arg5[%c0_24, %c0_25], %61 {strides = array<i32>} : memref<8x512xf32, #tpu.memory_space<vmem>>, vector<8x512xf32>,
    return
  }
  func.func @transform_0(%arg0: i32) -> (i32, i32) {
    %c0_i32 = arith.constant 0 : i32
    %c0_i32_0 = arith.constant 0 : i32
    return %arg0, %c0_i32 : i32, i32
  }
  func.func @transform_1(%arg0: i32) -> (i32, i32) {
    %c0_i32 = arith.constant 0 : i32
    %c0_i32_0 = arith.constant 0 : i32
    %c0_i32_1 = arith.constant 0 : i32
    return %c0_i32, %c0_i32_0 : i32, i32
  }
  func.func @transform_2(%arg0: i32) -> (i32, i32) {
    %c0_i32 = arith.constant 0 : i32
    %c0_i32_0 = arith.constant 0 : i32
    %c0_i32_1 = arith.constant 0 : i32
    return %c0_i32, %c0_i32_0 : i32, i32
  }
  func.func @transform_3(%arg0: i32) -> (i32, i32) {
    %c0_i32 = arith.constant 0 : i32
    %c0_i32_0 = arith.constant 0 : i32
    %c0_i32_1 = arith.constant 0 : i32
    return %c0_i32, %c0_i32_0 : i32, i32
  }
  func.func @transform_4(%arg0: i32) -> (i32, i32) {
    %c0_i32 = arith.constant 0 : i32
    %c0_i32_0 = arith.constant 0 : i32
    return %arg0, %c0_i32 : i32, i32
  }
}

</mosaic_0001>

<llo_original>
// kernel: tpu_custom_call.1
$region0: #{tpu_custom_call.1}
  #allocation0 [shape = 'u32[]', space=smem, size = 0x4, offset = 0x4, fixed_abs, tag = 'smem constant byte address 0x4 - core index']
  #allocation1 [shape = 'u32[144,128]{1,0:T(1,128)}', space=vmem, size = 0x12000, scoped, tag = 'internal scratch']
  %s0 = inlined_call_operand.hbm [shape: f32[8,48], index: 0, kind: input, shape index: {}]
  %s1 = inlined_call_operand.hbm [shape: f32[48,136], index: 1, kind: input, shape index: {}]
  %s2 = inlined_call_operand.hbm [shape: f32[136,512], index: 2, kind: input, shape index: {}]
  %s3 = inlined_call_operand.hbm [shape: f32[8,136], index: 3, kind: input, shape index: {}]
  %s4 = inlined_call_operand.hbm [shape: f32[8,512], index: 4, kind: output, shape index: {}]
  %s5 = sld [smem:[#allocation0]]
  $region42: #{tpu_custom_call.1} parent=0
    _
  %s7 = ssub.s32 1, %s5
  %s8 = scalar_select 0, %s7, %s5
  $region1: #{tpu_custom_call.1} parent=0
    #allocation2 [shape = 'u8[4096]{0}', space=vmem, size = 0x1000, scoped, tag = 'input window, operand 0, single buffered']
    #allocation3 [shape = 's32[1]{0}', space=sflag, size = 0x4, scoped, tag = 'scoped memory for tpu_custom_call.1']
    #allocation4 [shape = 's32[1]{0}', space=sflag, size = 0x4, scoped, tag = 'scoped memory for tpu_custom_call.1']
    #allocation5 [shape = 'u8[49152]{0}', space=vmem, size = 0xc000, scoped, tag = 'input window, operand 1, single buffered']
    #allocation6 [shape = 's32[1]{0}', space=sflag, size = 0x4, scoped, tag = 'scoped memory for tpu_custom_call.1']
    #allocation7 [shape = 'u8[278528]{0}', space=vmem, size = 0x44000, scoped, tag = 'input window, operand 2, single buffered']
    #allocation8 [shape = 'u8[8192]{0}', space=vmem, size = 0x2000, scoped, tag = 'input window, operand 3, single buffered']
    #allocation9 [shape = 's32[1]{0}', space=sflag, size = 0x4, scoped, tag = 'scoped memory for tpu_custom_call.1']
    #allocation10 [shape = 'u8[16384]{0}', space=vmem, size = 0x4000, scoped, tag = 'output window, operand 0, single buffered']
    %9 = vsyncpa [#allocation3], 0
    %10 = vsyncpa [#allocation6], 0
    %11 = vsyncpa [#allocation9], 0
    %12 = vsyncpa [#allocation4], 0
    // Predicated region
    $region2: #{tpu_custom_call.1} parent=1 // pred_check
      _
    $region3: #{tpu_custom_call.1} parent=1 // pred_check_branch
      %14 = sbr.rel (0) target = $region5
    $region4: #{tpu_custom_call.1} parent=1 // pred_region
      %s16 = ssub.s32 128, 128
      %17 = vsyncadd [#allocation3], %s16
      %s19 = sshll.u32 [#allocation2], 4
      %s20 = int_to_ptr.vmem [resolvable:$true] %s19
      %22 = dma.hbm_to_vmem [thread:$0]  %s0, 128, %s20, [#allocation3]
    $region5: #{tpu_custom_call.1} parent=1 // pred_fallthru
      _
    // Predicated region
    $region6: #{tpu_custom_call.1} parent=1 // pred_check
      _
    $region7: #{tpu_custom_call.1} parent=1 // pred_check_branch
      %24 = sbr.rel (0) target = $region9
    $region8: #{tpu_custom_call.1} parent=1 // pred_region
      %s26 = ssub.s32 1536, 1536
      %27 = vsyncadd [#allocation6], %s26
      %s28 = sshll.u32 [#allocation5], 4
      %s29 = int_to_ptr.vmem [resolvable:$true] %s28
      %34 = dma.hbm_to_vmem [thread:$0]  %s1, 1536, %s29, [#allocation6], 256, 256, 16
    $region9: #{tpu_custom_call.1} parent=1 // pred_fallthru
      _
    // Predicated region
    $region10: #{tpu_custom_call.1} parent=1 // pred_check
      _
    $region11: #{tpu_custom_call.1} parent=1 // pred_check_branch
      %36 = sbr.rel (0) target = $region13
    $region12: #{tpu_custom_call.1} parent=1 // pred_region
      %s38 = ssub.s32 8704, 8704
      %39 = vsyncadd [#allocation6], %s38
      %s40 = sshll.u32 [#allocation7], 4
      %s41 = int_to_ptr.vmem [resolvable:$true] %s40
      %46 = dma.hbm_to_vmem [thread:$0]  %s2, 8704, %s41, [#allocation6], 512, 512, 32
    $region13: #{tpu_custom_call.1} parent=1 // pred_fallthru
      _
    // Predicated region
    $region14: #{tpu_custom_call.1} parent=1 // pred_check
      _
    $region15: #{tpu_custom_call.1} parent=1 // pred_check_branch
      %48 = sbr.rel (0) target = $region17
    $region16: #{tpu_custom_call.1} parent=1 // pred_region
      %s50 = ssub.s32 256, 256
      %51 = vsyncadd [#allocation9], %s50
      %s53 = sshll.u32 [#allocation8], 4
      %s54 = int_to_ptr.vmem [resolvable:$true] %s53
      %56 = dma.hbm_to_vmem [thread:$0]  %s3, 256, %s54, [#allocation9]
    $region17: #{tpu_custom_call.1} parent=1 // pred_fallthru
      _
    // Predicated region
    $region18: #{tpu_custom_call.1} parent=1 // pred_check
      _
    $region19: #{tpu_custom_call.1} parent=1 // pred_check_branch
      %58 = sbr.rel (0) target = $region21
    $region20: #{tpu_custom_call.1} parent=1 // pred_region
      %59 = dma.done [#allocation3], 128
    $region21: #{tpu_custom_call.1} parent=1 // pred_fallthru
      _
    // Predicated region
    $region22: #{tpu_custom_call.1} parent=1 // pred_check
      _
    $region23: #{tpu_custom_call.1} parent=1 // pred_check_branch
      %61 = sbr.rel (0) target = $region25
    $region24: #{tpu_custom_call.1} parent=1 // pred_region
      %62 = dma.done [#allocation6], 1536
    $region25: #{tpu_custom_call.1} parent=1 // pred_fallthru
      _
    // Predicated region
    $region26: #{tpu_custom_call.1} parent=1 // pred_check
      _
    $region27: #{tpu_custom_call.1} parent=1 // pred_check_branch
      %64 = sbr.rel (0) target = $region29
    $region28: #{tpu_custom_call.1} parent=1 // pred_region
      %65 = dma.done [#allocation6], 8704
    $region29: #{tpu_custom_call.1} parent=1 // pred_fallthru
      _
    // Predicated region
    $region30: #{tpu_custom_call.1} parent=1 // pred_check
      _
    $region31: #{tpu_custom_call.1} parent=1 // pred_check_branch
      %67 = sbr.rel (0) target = $region33
    $region32: #{tpu_custom_call.1} parent=1 // pred_region
      %68 = dma.done [#allocation9], 256
    $region33: #{tpu_custom_call.1} parent=1 // pred_fallthru
      _
    %v69 = vld [vmem:[#allocation2] sm:$0xff]
    %v70 = vld [vmem:[#allocation8] ss:$8 sm:$0x3]
    %s71 = scalar_lea.vmem [#allocation8], 1
    %v72 = vld [vmem:[%s71] ss:$8 sm:$0x3]
    %s73 = scalar_lea.vmem [#allocation8], 2
    %v74 = vld [vmem:[%s73] ss:$8 sm:$0x3]
    %v75 = vcvt.f32.s32.to.zero.pseudo %v74
    %v76 = vld [vmem:[#allocation5] sm:$0xff]
    %v77 = vld [vmem:[#allocation5 + $0x8] sm:$0xff]
    %v78 = vld [vmem:[#allocation5 + $0x10] sm:$0xff]
    %v79 = vld [vmem:[#allocation5 + $0x18] sm:$0xff]
    %v80 = vld [vmem:[#allocation5 + $0x20] sm:$0xff]
    %v81 = vld [vmem:[#allocation5 + $0x28] sm:$0xff]
    %v82 = vld [vmem:[#allocation5 + $0x30] sm:$0xff]
    %v83 = vld [vmem:[#allocation5 + $0x38] sm:$0xff]
    %v84 = vld [vmem:[#allocation5 + $0x40] sm:$0xff]
    %v85 = vld [vmem:[#allocation5 + $0x48] sm:$0xff]
    %v86 = vld [vmem:[#allocation5 + $0x50] sm:$0xff]
    %v87 = vld [vmem:[#allocation5 + $0x58] sm:$0xff]
    %vm88 = vcmask 392192
    %v90 = vsel %vm88, %v69, 0
    %92 = vmatprep.subr.mxu0 0.0
    %93 = vmatpush1.msra.mxu0 0.0
    %94 = vmatprep.subr.mxu0 0.0
    %95 = vmatpush1.msra.mxu0 0.0
    %96 = vmatprep.subr.mxu0 0.0
    %97 = vmatpush1.msra.mxu0 0.0
    %98 = vmatprep.subr.mxu0 0.0
    %99 = vmatpush1.msra.mxu0 0.0
    %100 = vmatprep.subr.mxu0 0.0
    %101 = vmatpush1.msra.mxu0 0.0
    %102 = vmatprep.subr.mxu0 0.0
    %103 = vmatpush1.msra.mxu0 0.0
    %104 = vmatprep.subr.mxu0 0.0
    %105 = vmatpush1.msra.mxu0 0.0
    %106 = vmatprep.subr.mxu0 0.0
    %107 = vmatpush1.msra.mxu0 0.0
    %108 = vmatprep.subr.mxu0 0.0
    %109 = vmatpush1.msra.mxu0 0.0
    %110 = vmatprep.subr.mxu0 0.0
    %111 = vmatpush1.msra.mxu0 0.0
    %112 = vmatprep.subr.mxu0 %v87
    %113 = vmatpush1.msra.mxu0 %v86
    %114 = vmatprep.subr.mxu0 %v85
    %115 = vmatpush1.msra.mxu0 %v84
    %116 = vmatprep.subr.mxu0 %v83
    %117 = vmatpush1.msra.mxu0 %v82
    %118 = vmatprep.subr.mxu0 %v81
    %119 = vmatpush1.msra.mxu0 %v80
    %120 = vmatprep.subr.mxu0 %v79
    %121 = vmatpush1.msra.mxu0 %v78
    %122 = vmatprep.subr.mxu0 %v77
    %123 = vmatpush1.msra.mxu0 %v76
    %124 = vmatprep.subr.mxu0 0.0
    %125 = vmatpush2.msra.mxu0 0.0
    %126 = vmatprep.subr.mxu0 0.0
    %127 = vmatpush2.msra.mxu0 0.0
    %128 = vmatprep.subr.mxu0 0.0
    %129 = vmatpush2.msra.mxu0 0.0
    %130 = vmatprep.subr.mxu0 0.0
    %131 = vmatpush2.msra.mxu0 0.0
    %132 = vmatprep.subr.mxu0 0.0
    %133 = vmatpush2.msra.mxu0 0.0
    %134 = vmatprep.subr.mxu0 0.0
    %135 = vmatpush2.msra.mxu0 0.0
    %136 = vmatprep.subr.mxu0 0.0
    %137 = vmatpush2.msra.mxu0 0.0
    %138 = vmatprep.subr.mxu0 0.0
    %139 = vmatpush2.msra.mxu0 0.0
    %140 = vmatprep.subr.mxu0 0.0
    %141 = vmatpush2.msra.mxu0 0.0
    %142 = vmatprep.subr.mxu0 0.0
    %143 = vmatpush2.msra.mxu0 0.0
    %144 = vmatprep.subr.mxu0 0.0
    %145 = vmatpush2.msra.mxu0 0.0
    %146 = vmatprep.subr.mxu0 0.0
    %147 = vmatpush2.msra.mxu0 0.0
    %148 = vmatprep.subr.mxu0 0.0
    %149 = vmatpush2.msra.mxu0 0.0
    %150 = vmatprep.subr.mxu0 0.0
    %151 = vmatpush2.msra.mxu0 0.0
    %152 = vmatprep.subr.mxu0 0.0
    %153 = vmatpush2.msra.mxu0 0.0
    %154 = vmatprep.subr.mxu0 0.0
    %155 = vmatpush2.msra.mxu0 0.0
    %156 = vmatprep.mubr.f32.mxu0 0.0
    %157 = vmatmul.mubr.f32.gmra.mxu0 %v90
    %v158 = vpop.f32.mrf.mxu0
    %v159 = vadd.f32 0.0, %v158
    %v160 = vpop.f32.mrf.mxu0
    %v161 = vadd.f32 0.0, %v160
    %162 = vdwg.mxu0
    %v163 = vrcp.pop 16.0
    %v164 = vmul.f32 %v159, %v163
    %v165 = vmul.f32 %v161, %v163
    %v166 = vfloor.f32 %v164
    %v167 = vfloor.f32 %v165
    %v168 = vmul.f32 %v166, 16.0
    %v169 = vmul.f32 %v167, 16.0
    %v170 = vsub.f32 %v159, %v168
    %v171 = vsub.f32 %v161, %v169
    %vm172 = vcmp.lt.f32.partialorder %v170, 0.0
    %vm173 = vcmp.lt.f32.partialorder %v171, 0.0
    %v174 = vadd.f32 %v170, 16.0
    %v175 = vadd.f32 %v171, 16.0
    %v176 = vsel %vm172, %v174, %v170
    %v177 = vsel %vm173, %v175, %v171
    %vm178 = vcmp.ge.f32.partialorder %v176, 16.0
    %vm179 = vcmp.ge.f32.partialorder %v177, 16.0
    %v180 = vsub.f32 %v176, 16.0
    %v181 = vsub.f32 %v177, 16.0
    %v182 = vsel %vm178, %v180, %v176
    %v183 = vsel %vm179, %v181, %v177
    %v184 = vmul.f32 %v182, 2.0
    %v185 = vmul.f32 %v183, 2.0
    %v186 = vrcp.pop 11.0
    %v187 = vmul.f32 %v184, %v186
    %v188 = vmul.f32 %v185, %v186
    %v189 = vadd.f32 %v187, -1.0
    %v190 = vadd.f32 %v188, -1.0
    %v191 = vsub.f32 %v159, %v182
    %v192 = vsub.f32 %v161, %v183
    %v193 = vmul.f32 %v191, 2.0
    %v194 = vmul.f32 %v192, 2.0
    %v195 = vrcp.pop 15.0
    %v196 = vmul.f32 %v193, %v195
    %v197 = vmul.f32 %v194, %v195
    %v198 = vadd.f32 %v196, -1.0
    %v199 = vadd.f32 %v197, -1.0
    %s200 = smul.u32 0, 8
    %v201 = vlaneseq
    %v202 = vshrl.u32 %v201, 7
    %v203 = vstv %s200
    %v204 = vadd.s32 %v203, %v202
    %v205 = vmul.u32 %v204, 16
    %v206 = vlaneseq
    %v207 = vshrl.u32 %v206, 7
    %v208 = vsub.s32 0, %v207
    %v209 = vrot.slane %v75, %v208
    %v210 = vlaneseq
    %v211 = vshrl.u32 %v210, 7
    %v212 = vsub.s32 1, %v211
    %v213 = vrot.slane %v75, %v212
    %v214 = vadd.s32 %v205, %v209
    %v215 = vadd.s32 %v205, %v213
    %vm216 = vcmp.lt.s32.totalorder %v214, 8
    %vm217 = vcmp.lt.s32.totalorder %v215, 8
    %v218 = vsel %vm216, %v189, %v198
    %v219 = vsel %vm217, %v190, %v199
    %vm220 = vcmp.lt.f32.partialorder %v159, 0.0
    %vm221 = vcmp.lt.f32.partialorder %v161, 0.0
    %v222 = vceil.f32 %v159
    %v223 = vceil.f32 %v161
    %v224 = vfloor.f32 %v159
    %v225 = vfloor.f32 %v161
    %v226 = vsel %vm220, %v222, %v224
    %v227 = vsel %vm221, %v223, %v225
    %v229 = vlaneseq
    %v230 = vshrl.u32 %v229, 7
    %v231 = vsub.s32 0, %v230
    %v232 = vrot.slane %v70, %v231
    %v233 = vlaneseq
    %v234 = vshrl.u32 %v233, 7
    %v235 = vsub.s32 1, %v234
    %v236 = vrot.slane %v70, %v235
    %vm239 = vcmp.eq.f32.partialorder %v226, %v232
    %vm240 = vcmp.eq.f32.partialorder %v227, %v236
    %v241 = vsel %vm239, 1, 0
    %v242 = vsel %vm240, 1, 0
    %v243 = vcvt.s32.f32 %v241
    %v244 = vcvt.s32.f32 %v242
    %v246 = vlaneseq
    %v247 = vshrl.u32 %v246, 7
    %v248 = vsub.s32 0, %v247
    %v249 = vrot.slane %v72, %v248
    %v250 = vlaneseq
    %v251 = vshrl.u32 %v250, 7
    %v252 = vsub.s32 1, %v251
    %v253 = vrot.slane %v72, %v252
    %v256 = vmul.f32 %v218, %v249
    %v257 = vmul.f32 %v219, %v253
    %v258 = vadd.f32 %v243, %v256
    %v259 = vadd.f32 %v244, %v257
    %v260 = vld [vmem:[#allocation7] sm:$0xff]
    %v261 = vld [vmem:[#allocation7 + $0x8] sm:$0xff]
    %v262 = vld [vmem:[#allocation7 + $0x10] sm:$0xff]
    %v263 = vld [vmem:[#allocation7 + $0x18] sm:$0xff]
    %v264 = vld [vmem:[#allocation7 + $0x20] sm:$0xff]
    %v265 = vld [vmem:[#allocation7 + $0x28] sm:$0xff]
    %v266 = vld [vmem:[#allocation7 + $0x30] sm:$0xff]
    %v267 = vld [vmem:[#allocation7 + $0x38] sm:$0xff]
    %v268 = vld [vmem:[#allocation7 + $0x40] sm:$0xff]
    %v269 = vld [vmem:[#allocation7 + $0x48] sm:$0xff]
    %v270 = vld [vmem:[#allocation7 + $0x50] sm:$0xff]
    %v271 = vld [vmem:[#allocation7 + $0x58] sm:$0xff]
    %v272 = vld [vmem:[#allocation7 + $0x60] sm:$0xff]
    %v273 = vld [vmem:[#allocation7 + $0x68] sm:$0xff]
    %v274 = vld [vmem:[#allocation7 + $0x70] sm:$0xff]
    %v275 = vld [vmem:[#allocation7 + $0x78] sm:$0xff]
    %v276 = vld [vmem:[#allocation7 + $0x80] sm:$0xff]
    %v277 = vld [vmem:[#allocation7 + $0x88] sm:$0xff]
    %v278 = vld [vmem:[#allocation7 + $0x90] sm:$0xff]
    %v279 = vld [vmem:[#allocation7 + $0x98] sm:$0xff]
    %v280 = vld [vmem:[#allocation7 + $0xa0] sm:$0xff]
    %v281 = vld [vmem:[#allocation7 + $0xa8] sm:$0xff]
    %v282 = vld [vmem:[#allocation7 + $0xb0] sm:$0xff]
    %v283 = vld [vmem:[#allocation7 + $0xb8] sm:$0xff]
    %v284 = vld [vmem:[#allocation7 + $0xc0] sm:$0xff]
    %v285 = vld [vmem:[#allocation7 + $0xc8] sm:$0xff]
    %v286 = vld [vmem:[#allocation7 + $0xd0] sm:$0xff]
    %v287 = vld [vmem:[#allocation7 + $0xd8] sm:$0xff]
    %v288 = vld [vmem:[#allocation7 + $0xe0] sm:$0xff]
    %v289 = vld [vmem:[#allocation7 + $0xe8] sm:$0xff]
    %v290 = vld [vmem:[#allocation7 + $0xf0] sm:$0xff]
    %v291 = vld [vmem:[#allocation7 + $0xf8] sm:$0xff]
    %v292 = vld [vmem:[#allocation7 + $0x100] sm:$0xff]
    %v293 = vld [vmem:[#allocation7 + $0x108] sm:$0xff]
    %v294 = vld [vmem:[#allocation7 + $0x110] sm:$0xff]
    %v295 = vld [vmem:[#allocation7 + $0x118] sm:$0xff]
    %v296 = vld [vmem:[#allocation7 + $0x120] sm:$0xff]
    %v297 = vld [vmem:[#allocation7 + $0x128] sm:$0xff]
    %v298 = vld [vmem:[#allocation7 + $0x130] sm:$0xff]
    %v299 = vld [vmem:[#allocation7 + $0x138] sm:$0xff]
    %v300 = vld [vmem:[#allocation7 + $0x140] sm:$0xff]
    %v301 = vld [vmem:[#allocation7 + $0x148] sm:$0xff]
    %v302 = vld [vmem:[#allocation7 + $0x150] sm:$0xff]
    %v303 = vld [vmem:[#allocation7 + $0x158] sm:$0xff]
    %v304 = vld [vmem:[#allocation7 + $0x160] sm:$0xff]
    %v305 = vld [vmem:[#allocation7 + $0x168] sm:$0xff]
    %v306 = vld [vmem:[#allocation7 + $0x170] sm:$0xff]
    %v307 = vld [vmem:[#allocation7 + $0x178] sm:$0xff]
    %v308 = vld [vmem:[#allocation7 + $0x180] sm:$0xff]
    %v309 = vld [vmem:[#allocation7 + $0x188] sm:$0xff]
    %v310 = vld [vmem:[#allocation7 + $0x190] sm:$0xff]
    %v311 = vld [vmem:[#allocation7 + $0x198] sm:$0xff]
    %v312 = vld [vmem:[#allocation7 + $0x1a0] sm:$0xff]
    %v313 = vld [vmem:[#allocation7 + $0x1a8] sm:$0xff]
    %v314 = vld [vmem:[#allocation7 + $0x1b0] sm:$0xff]
    %v315 = vld [vmem:[#allocation7 + $0x1b8] sm:$0xff]
    %v316 = vld [vmem:[#allocation7 + $0x1c0] sm:$0xff]
    %v317 = vld [vmem:[#allocation7 + $0x1c8] sm:$0xff]
    %v318 = vld [vmem:[#allocation7 + $0x1d0] sm:$0xff]
    %v319 = vld [vmem:[#allocation7 + $0x1d8] sm:$0xff]
    %v320 = vld [vmem:[#allocation7 + $0x1e0] sm:$0xff]
    %v321 = vld [vmem:[#allocation7 + $0x1e8] sm:$0xff]
    %v322 = vld [vmem:[#allocation7 + $0x1f0] sm:$0xff]
    %v323 = vld [vmem:[#allocation7 + $0x1f8] sm:$0xff]
    %v324 = vld [vmem:[#allocation7 + $0x200] sm:$0xff]
    %v325 = vld [vmem:[#allocation7 + $0x208] sm:$0xff]
    %v326 = vld [vmem:[#allocation7 + $0x210] sm:$0xff]
    %v327 = vld [vmem:[#allocation7 + $0x218] sm:$0xff]
    %vm328 = vcmask 64512
    %v330 = vsel %vm328, %v259, 0
    %332 = vmatprep.subr.mxu0 %v321
    %333 = vmatpush1.msra.mxu0 %v320
    %334 = vmatprep.subr.mxu0 %v317
    %335 = vmatpush1.msra.mxu0 %v316
    %336 = vmatprep.subr.mxu0 %v313
    %337 = vmatpush1.msra.mxu0 %v312
    %338 = vmatprep.subr.mxu0 %v309
    %339 = vmatpush1.msra.mxu0 %v308
    %340 = vmatprep.subr.mxu0 %v305
    %341 = vmatpush1.msra.mxu0 %v304
    %342 = vmatprep.subr.mxu0 %v301
    %343 = vmatpush1.msra.mxu0 %v300
    %344 = vmatprep.subr.mxu0 %v297
    %345 = vmatpush1.msra.mxu0 %v296
    %346 = vmatprep.subr.mxu0 %v293
    %347 = vmatpush1.msra.mxu0 %v292
    %348 = vmatprep.subr.mxu0 %v289
    %349 = vmatpush1.msra.mxu0 %v288
    %350 = vmatprep.subr.mxu0 %v285
    %351 = vmatpush1.msra.mxu0 %v284
    %352 = vmatprep.subr.mxu0 %v281
    %353 = vmatpush1.msra.mxu0 %v280
    %354 = vmatprep.subr.mxu0 %v277
    %355 = vmatpush1.msra.mxu0 %v276
    %356 = vmatprep.subr.mxu0 %v273
    %357 = vmatpush1.msra.mxu0 %v272
    %358 = vmatprep.subr.mxu0 %v269
    %359 = vmatpush1.msra.mxu0 %v268
    %360 = vmatprep.subr.mxu0 %v265
    %361 = vmatpush1.msra.mxu0 %v264
    %362 = vmatprep.subr.mxu0 %v261
    %363 = vmatpush1.msra.mxu0 %v260
    %364 = vmatprep.subr.mxu0 0.0
    %365 = vmatpush2.msra.mxu0 0.0
    %366 = vmatprep.subr.mxu0 0.0
    %367 = vmatpush2.msra.mxu0 0.0
    %368 = vmatprep.subr.mxu0 0.0
    %369 = vmatpush2.msra.mxu0 0.0
    %370 = vmatprep.subr.mxu0 0.0
    %371 = vmatpush2.msra.mxu0 0.0
    %372 = vmatprep.subr.mxu0 0.0
    %373 = vmatpush2.msra.mxu0 0.0
    %374 = vmatprep.subr.mxu0 0.0
    %375 = vmatpush2.msra.mxu0 0.0
    %376 = vmatprep.subr.mxu0 0.0
    %377 = vmatpush2.msra.mxu0 0.0
    %378 = vmatprep.subr.mxu0 0.0
    %379 = vmatpush2.msra.mxu0 0.0
    %380 = vmatprep.subr.mxu0 0.0
    %381 = vmatpush2.msra.mxu0 0.0
    %382 = vmatprep.subr.mxu0 0.0
    %383 = vmatpush2.msra.mxu0 0.0
    %384 = vmatprep.subr.mxu0 0.0
    %385 = vmatpush2.msra.mxu0 0.0
    %386 = vmatprep.subr.mxu0 0.0
    %387 = vmatpush2.msra.mxu0 0.0
    %388 = vmatprep.subr.mxu0 0.0
    %389 = vmatpush2.msra.mxu0 0.0
    %390 = vmatprep.subr.mxu0 0.0
    %391 = vmatpush2.msra.mxu0 0.0
    %392 = vmatprep.subr.mxu0 0.0
    %393 = vmatpush2.msra.mxu0 0.0
    %394 = vmatprep.subr.mxu0 %v325
    %395 = vmatpush2.msra.mxu0 %v324
    %396 = vmatprep.mubr.f32.mxu0 %v330
    %397 = vmatmul.mubr.f32.gmra.mxu0 %v258
    %v398 = vpop.f32.mrf.mxu0
    %v399 = vadd.f32 0.0, %v398
    %v400 = vpop.f32.mrf.mxu0
    %v401 = vadd.f32 0.0, %v400
    %402 = vdwg.mxu0
    %403 = vmatprep.subr.mxu0 %v323
    %404 = vmatpush1.msra.mxu0 %v322
    %405 = vmatprep.subr.mxu0 %v319
    %406 = vmatpush1.msra.mxu0 %v318
    %407 = vmatprep.subr.mxu0 %v315
    %408 = vmatpush1.msra.mxu0 %v314
    %409 = vmatprep.subr.mxu0 %v311
    %410 = vmatpush1.msra.mxu0 %v310
    %411 = vmatprep.subr.mxu0 %v307
    %412 = vmatpush1.msra.mxu0 %v306
    %413 = vmatprep.subr.mxu0 %v303
    %414 = vmatpush1.msra.mxu0 %v302
    %415 = vmatprep.subr.mxu0 %v299
    %416 = vmatpush1.msra.mxu0 %v298
    %417 = vmatprep.subr.mxu0 %v295
    %418 = vmatpush1.msra.mxu0 %v294
    %419 = vmatprep.subr.mxu0 %v291
    %420 = vmatpush1.msra.mxu0 %v290
    %421 = vmatprep.subr.mxu0 %v287
    %422 = vmatpush1.msra.mxu0 %v286
    %423 = vmatprep.subr.mxu0 %v283
    %424 = vmatpush1.msra.mxu0 %v282
    %425 = vmatprep.subr.mxu0 %v279
    %426 = vmatpush1.msra.mxu0 %v278
    %427 = vmatprep.subr.mxu0 %v275
    %428 = vmatpush1.msra.mxu0 %v274
    %429 = vmatprep.subr.mxu0 %v271
    %430 = vmatpush1.msra.mxu0 %v270
    %431 = vmatprep.subr.mxu0 %v267
    %432 = vmatpush1.msra.mxu0 %v266
    %433 = vmatprep.subr.mxu0 %v263
    %434 = vmatpush1.msra.mxu0 %v262
    %435 = vmatprep.subr.mxu0 0.0
    %436 = vmatpush2.msra.mxu0 0.0
    %437 = vmatprep.subr.mxu0 0.0
    %438 = vmatpush2.msra.mxu0 0.0
    %439 = vmatprep.subr.mxu0 0.0
    %440 = vmatpush2.msra.mxu0 0.0
    %441 = vmatprep.subr.mxu0 0.0
    %442 = vmatpush2.msra.mxu0 0.0
    %443 = vmatprep.subr.mxu0 0.0
    %444 = vmatpush2.msra.mxu0 0.0
    %445 = vmatprep.subr.mxu0 0.0
    %446 = vmatpush2.msra.mxu0 0.0
    %447 = vmatprep.subr.mxu0 0.0
    %448 = vmatpush2.msra.mxu0 0.0
    %449 = vmatprep.subr.mxu0 0.0
    %450 = vmatpush2.msra.mxu0 0.0
    %451 = vmatprep.subr.mxu0 0.0
    %452 = vmatpush2.msra.mxu0 0.0
    %453 = vmatprep.subr.mxu0 0.0
    %454 = vmatpush2.msra.mxu0 0.0
    %455 = vmatprep.subr.mxu0 0.0
    %456 = vmatpush2.msra.mxu0 0.0
    %457 = vmatprep.subr.mxu0 0.0
    %458 = vmatpush2.msra.mxu0 0.0
    %459 = vmatprep.subr.mxu0 0.0
    %460 = vmatpush2.msra.mxu0 0.0
    %461 = vmatprep.subr.mxu0 0.0
    %462 = vmatpush2.msra.mxu0 0.0
    %463 = vmatprep.subr.mxu0 0.0
    %464 = vmatpush2.msra.mxu0 0.0
    %465 = vmatprep.subr.mxu0 %v327
    %466 = vmatpush2.msra.mxu0 %v326
    %467 = vmatprep.mubr.f32.mxu0 %v330
    %468 = vmatmul.mubr.f32.gmra.mxu0 %v258
    %v469 = vpop.f32.mrf.mxu0
    %v470 = vadd.f32 0.0, %v469
    %v471 = vpop.f32.mrf.mxu0
    %v472 = vadd.f32 0.0, %v471
    %473 = vdwg.mxu0
    %474 = vst [vmem:[#allocation10] sm:$0xff] %v399
    %475 = vst [vmem:[#allocation10 + $0x8] sm:$0xff] %v401
    %476 = vst [vmem:[#allocation10 + $0x10] sm:$0xff] %v470
    %477 = vst [vmem:[#allocation10 + $0x18] sm:$0xff] %v472
    // Predicated region
    $region34: #{tpu_custom_call.1} parent=1 // pred_check
      _
    $region35: #{tpu_custom_call.1} parent=1 // pred_check_branch
      %479 = sbr.rel (0) target = $region37
    $region36: #{tpu_custom_call.1} parent=1 // pred_region
      %s481 = ssub.s32 512, 512
      %482 = vsyncadd [#allocation4], %s481
      %s484 = sshll.u32 [#allocation10], 4
      %s485 = int_to_ptr.vmem [resolvable:$true] %s484
      %487 = dma.vmem_to_hbm [thread:$0]  %s485, 512, %s4, [#allocation4]
    $region37: #{tpu_custom_call.1} parent=1 // pred_fallthru
      _
    // Predicated region
    $region38: #{tpu_custom_call.1} parent=1 // pred_check
      _
    $region39: #{tpu_custom_call.1} parent=1 // pred_check_branch
      %489 = sbr.rel (0) target = $region41
    $region40: #{tpu_custom_call.1} parent=1 // pred_region
      %490 = dma.done [#allocation4], 512
    $region41: #{tpu_custom_call.1} parent=1 // pred_fallthru
      _
    %491 = vsyncpa [#allocation3], 1
    %492 = vsyncpa [#allocation6], 1
    %493 = vsyncpa [#allocation9], 1
    %494 = vsyncpa [#allocation4], 1

</llo_original>
